<compile_context>
chip_gen: v5e
topology: v5e:2x2
jax: 0.10.0
libtpu: 0.0.40
codegen_flags: <defaults>
</compile_context>

<pallas_src>
import jax
import jax.numpy as jnp
from jax.experimental import pallas as pl
from jax.experimental.pallas import tpu as pltpu


def _sigmoid(z):
    # sigmoid(z) == 0.5 * (1 + tanh(z / 2)): one EUP op (tanh) per element
    # instead of exp + divide, and it saturates cleanly (no overflow).
    return 0.5 * jnp.tanh(0.5 * z) + 0.5


def detector_kernel(x_ref, w1_ref, b1_ref, w2_ref, b2_ref, out_ref):
    # Layer 1 on the MXU: (TB, F) @ (F, D) -> (TB, D), f32 accumulate.
    h = jnp.dot(x_ref[...], w1_ref[...], preferred_element_type=jnp.float32)

    # Lane-dense layout for everything after the matmul: (TB, D) -> (D, TB)
    # via a single XLU transpose (D = detect_dim is tiny, so this makes the
    # VPU/EUP work ~128/D times denser).
    h_t = jnp.transpose(h)                               # (D, TB)
    f_t = _sigmoid(h_t + b1_ref[...])                    # b1 is (D, 1) -> broadcast

    # Layer 2 on the (otherwise idle) MXU: (1, D) @ (D, TB) -> (1, TB).
    o = jnp.dot(w2_ref[...], f_t, preferred_element_type=jnp.float32)
    o = o + b2_ref[0, 0]                                 # scalar bias from SMEM
    out_ref[...] = _sigmoid(o).astype(out_ref.dtype)     # lane-dense (1, TB) store


def _choose_batch_block(batch, block_b):
    """Pick the batch tile: a multiple of 128 when tiling, the full extent
    otherwise, and >= 2 blocks for large batches (v7x megacore)."""
    if batch <= block_b:
        if batch >= 1024:
            # Split into (at least) two 128-aligned blocks so both v7x TCs work.
            half = pl.cdiv(batch, 2)
            return max(128, pl.cdiv(half, 128) * 128)
        return batch                      # single full-extent block (always legal)
    tb = max(128, (block_b // 128) * 128)
    return batch if tb >= batch else tb


def detector_forward(x, w1, b1, w2, b2, *, block_b=16384):
    """x: (B, feature_dim); w1: (feature_dim, detect_dim); b1: (1, detect_dim);
    w2: (detect_dim, 1); b2: (1, 1).  Returns (B, 1) =
    sigmoid(sigmoid(x @ w1 + b1) @ w2 + b2)."""
    B, feature_dim = x.shape
    detect_dim = w1.shape[1]

    # Wrapper-side layout plumbing only (no compute hoisting):
    b1_col = b1.reshape(detect_dim, 1)    # broadcasts against the (D, TB) layout
    w2_row = w2.reshape(1, detect_dim)    # (1, D) row for the MXU layer-2 matmul
    b2_2d = b2.reshape(1, 1)              # single scalar -> SMEM

    tb = _choose_batch_block(B, block_b)
    num_blocks = pl.cdiv(B, tb)
    padded_b = num_blocks * tb

    dtype_bytes = jnp.dtype(x.dtype).itemsize
    cost = pl.CostEstimate(
        flops=2 * B * feature_dim * detect_dim      # layer 1 matmul
        + 2 * B * detect_dim                        # layer 2 matmul
        + 2 * B * detect_dim + 2 * B,               # bias adds / transposed path
        transcendentals=B * (detect_dim + 1),       # one tanh per sigmoid element
        bytes_accessed=(x.size + w1.size + b1.size + w2.size + b2.size + B)
        * dtype_bytes,
    )

    out_row = pl.pallas_call(
        detector_kernel,
        out_shape=jax.ShapeDtypeStruct((1, padded_b), x.dtype),
        grid=(num_blocks,),
        in_specs=[
            # x: tiled over batch only; feature dim is the full extent.
            pl.BlockSpec((tb, feature_dim), lambda i: (i, 0)),
            # Weights / b1 / w2: full blocks, resident across all grid steps.
            pl.BlockSpec((feature_dim, detect_dim), lambda i: (0, 0)),
            pl.BlockSpec((detect_dim, 1), lambda i: (0, 0)),
            pl.BlockSpec((1, detect_dim), lambda i: (0, 0)),
            # b2: single scalar -> SMEM (no VMEM tile / vector DMA).
            pl.BlockSpec(memory_space=pltpu.MemorySpace.SMEM),
        ],
        # Lane-dense output: each step owns a contiguous TB-wide row chunk.
        out_specs=pl.BlockSpec((1, tb), lambda i: (0, i)),
        compiler_params=pltpu.CompilerParams(
            dimension_semantics=("parallel",),      # megacore sharding on v7x
            vmem_limit_bytes=48 * 1024 * 1024,      # fits v7x (64 MiB physical)
        ),
        cost_estimate=cost,
    )(x, w1, b1_col, w2_row, b2_2d)

    # Padded tail rows (if any) carry garbage from the partial edge block; each
    # output row depends only on its own input row, so valid rows are exact.
    return out_row[0, :B].reshape(B, 1)


def init_params(key, feature_dim, detect_dim, dtype=jnp.float32):
    """Deterministic synthetic init mirroring nn.Linear shapes (stored transposed)."""
    k1, k2, k3, k4 = jax.random.split(key, 4)
    lim1 = 1.0 / jnp.sqrt(feature_dim)
    lim2 = 1.0 / jnp.sqrt(detect_dim)
    w1 = jax.random.uniform(k1, (feature_dim, detect_dim), dtype, -lim1, lim1)
    b1 = jax.random.uniform(k2, (1, detect_dim), dtype, -lim1, lim1)
    w2 = jax.random.uniform(k3, (detect_dim, 1), dtype, -lim2, lim2)
    b2 = jax.random.uniform(k4, (1, 1), dtype, -lim2, lim2)
    return w1, b1, w2, b2


def _reference(x, w1, b1, w2, b2):
    return jax.nn.sigmoid(jax.nn.sigmoid(x @ w1 + b1) @ w2 + b2)


if __name__ == "__main__":
    # config = {'feature_dim': 32, 'detect_dim': 16}
    feature_dim, detect_dim = 32, 16

    key = jax.random.PRNGKey(0)
    kx, kp = jax.random.split(key)
    w1, b1, w2, b2 = init_params(kp, feature_dim, detect_dim)

    # 1) Small batch: single full-extent block.
    x = jax.random.normal(kx, (8, feature_dim), jnp.float32)
    out = jax.block_until_ready(detector_forward(x, w1, b1, w2, b2))
    assert out.shape == (8, 1)
    assert jnp.allclose(out, _reference(x, w1, b1, w2, b2), atol=1e-5, rtol=1e-5)

    # 2) Multi-block, evenly divisible (grid = 5, lane-dense 128-wide tiles).
    x2 = jax.random.normal(kx, (640, feature_dim), jnp.float32)
    out2 = jax.block_until_ready(detector_forward(x2, w1, b1, w2, b2, block_b=128))
    assert out2.shape == (640, 1)
    assert jnp.allclose(out2, _reference(x2, w1, b1, w2, b2), atol=1e-5, rtol=1e-5)

    # 3) Multi-block with a partial edge block (grid = 3, padded output sliced).
    x3 = jax.random.normal(kx, (300, feature_dim), jnp.float32)
    out3 = jax.block_until_ready(detector_forward(x3, w1, b1, w2, b2, block_b=128))
    assert out3.shape == (300, 1)
    assert jnp.allclose(out3, _reference(x3, w1, b1, w2, b2), atol=1e-5, rtol=1e-5)

    # 4) Large-ish batch with default block_b: auto-split into >=2 blocks (v7x).
    x4 = jax.random.normal(kx, (2048, feature_dim), jnp.float32)
    out4 = jax.block_until_ready(detector_forward(x4, w1, b1, w2, b2))
    assert out4.shape == (2048, 1)
    assert jnp.allclose(out4, _reference(x4, w1, b1, w2, b2), atol=1e-5, rtol=1e-5)

    print("KERNEL_OK")
</pallas_src>

<mosaic_0001>
module attributes {stable_mosaic.version = 11 : i64} {
  func.func @detector_kernel(%arg0: i32, %arg1: memref<8x32xf32, #tpu.memory_space<vmem>>, %arg2: memref<32x16xf32, #tpu.memory_space<vmem>>, %arg3: memref<16x1xf32, #tpu.memory_space<vmem>>, %arg4: memref<1x16xf32, #tpu.memory_space<vmem>>, %arg5: memref<1x1xf32, #tpu.memory_space<smem>>, %arg6: memref<1x8xf32, #tpu.memory_space<vmem>>) attributes {dimension_semantics = [#tpu.dimension_semantics<parallel>], iteration_bounds = array<i64: 1>, scalar_prefetch = 0 : i64, scratch_operands = 0 : i64, tpu.core_type = #tpu.core_type<tc>, window_params = [{transform_indices = @transform_0, window_bounds = array<i64: 8, 32>}, {pipeline_mode = #tpu.pipeline_mode<synchronous>, transform_indices = @transform_1, window_bounds = array<i64: 32, 16>}, {pipeline_mode = #tpu.pipeline_mode<synchronous>, transform_indices = @transform_2, window_bounds = array<i64: 16, 1>}, {pipeline_mode = #tpu.pipeline_mode<synchronous>, transform_indices = @transform_3, window_bounds = array<i64: 1, 16>}, {transform_indices = @transform_4, window_bounds = array<i64: 1, 1>}, {transform_indices = @transform_5, window_bounds = array<i64: 1, 8>}]} {
    %c0 = arith.constant 0 : index
    %c0_0 = arith.constant 0 : index
    %0 = vector.load %arg1[%c0, %c0_0] : memref<8x32xf32, #tpu.memory_space<vmem>>, vector<8x32xf32>
    %c0_1 = arith.constant 0 : index
    %c0_2 = arith.constant 0 : index
    %1 = vector.load %arg2[%c0_1, %c0_2] : memref<32x16xf32, #tpu.memory_space<vmem>>, vector<32x16xf32>
    %cst = arith.constant dense<0.000000e+00> : vector<8x16xf32>
    %2 = tpu.matmul %0, %1, %cst {dimension_numbers = #tpu.dot_dimension_numbers<[1], [0], [0], [1], [0, 0, 1, 1], [], []>} : vector<8x32xf32>, vector<32x16xf32>, vector<8x16xf32> -> vector<8x16xf32>
    %3 = tpu.transpose %2, [1, 0] : vector<8x16xf32> -> vector<16x8xf32>
    %c0_3 = arith.constant 0 : index
    %c0_4 = arith.constant 0 : index
    %4 = vector.load %arg3[%c0_3, %c0_4] : memref<16x1xf32, #tpu.memory_space<vmem>>, vector<16x1xf32>
    %5 = vector.broadcast %4 : vector<16x1xf32> to vector<16x8xf32>
    %6 = arith.addf %3, %5 : vector<16x8xf32>
    %cst_5 = arith.constant 5.000000e-01 : f32
    %7 = vector.broadcast %cst_5 : f32 to vector<16x8xf32>
    %8 = arith.mulf %7, %6 : vector<16x8xf32>
    %9 = math.tanh %8 : vector<16x8xf32>
    %cst_6 = arith.constant 5.000000e-01 : f32
    %10 = vector.broadcast %cst_6 : f32 to vector<16x8xf32>
    %11 = arith.mulf %10, %9 : vector<16x8xf32>
    %cst_7 = arith.constant 5.000000e-01 : f32
    %12 = vector.broadcast %cst_7 : f32 to vector<16x8xf32>
    %13 = arith.addf %11, %12 : vector<16x8xf32>
    %c0_8 = arith.constant 0 : index
    %c0_9 = arith.constant 0 : index
    %14 = vector.load %arg4[%c0_8, %c0_9] : memref<1x16xf32, #tpu.memory_space<vmem>>, vector<1x16xf32>
    %cst_10 = arith.constant dense<0.000000e+00> : vector<1x8xf32>
    %15 = tpu.matmul %14, %13, %cst_10 {dimension_numbers = #tpu.dot_dimension_numbers<[1], [0], [0], [1], [0, 0, 1, 1], [], []>} : vector<1x16xf32>, vector<16x8xf32>, vector<1x8xf32> -> vector<1x8xf32>
    %c0_11 = arith.constant 0 : index
    %c0_12 = arith.constant 0 : index
    %16 = memref.load %arg5[%c0_11, %c0_12] : memref<1x1xf32, #tpu.memory_space<smem>>
    %17 = vector.broadcast %16 : f32 to vector<1x8xf32>
    %18 = arith.addf %15, %17 : vector<1x8xf32>
    %cst_13 = arith.constant 5.000000e-01 : f32
    %19 = vector.broadcast %cst_13 : f32 to vector<1x8xf32>
    %20 = arith.mulf %19, %18 : vector<1x8xf32>
    %21 = math.tanh %20 : vector<1x8xf32>
    %cst_14 = arith.constant 5.000000e-01 : f32
    %22 = vector.broadcast %cst_14 : f32 to vector<1x8xf32>
    %23 = arith.mulf %22, %21 : vector<1x8xf32>
    %cst_15 = arith.constant 5.000000e-01 : f32
    %24 = vector.broadcast %cst_15 : f32 to vector<1x8xf32>
    %25 = arith.addf %23, %24 : vector<1x8xf32>
    %c0_16 = arith.constant 0 : index
    %c0_17 = arith.constant 0 : index
    %26 = vector.load %arg6[%c0_16, %c0_17] : memref<1x8xf32, #tpu.memory_space<vmem>>, vector<1x8xf32>
    tpu.vector_store %arg6[%c0_16, %c0_17], %25 {strides = array<i32>} : memref<1x8xf32, #tpu.memory_space<vmem>>, vector<1x8xf32>,
    return
  }
  func.func @transform_0(%arg0: i32) -> (i32, i32) {
    %c0_i32 = arith.constant 0 : i32
    %c0_i32_0 = arith.constant 0 : i32
    return %arg0, %c0_i32 : i32, i32
  }
  func.func @transform_1(%arg0: i32) -> (i32, i32) {
    %c0_i32 = arith.constant 0 : i32
    %c0_i32_0 = arith.constant 0 : i32
    %c0_i32_1 = arith.constant 0 : i32
    return %c0_i32, %c0_i32_0 : i32, i32
  }
  func.func @transform_2(%arg0: i32) -> (i32, i32) {
    %c0_i32 = arith.constant 0 : i32
    %c0_i32_0 = arith.constant 0 : i32
    %c0_i32_1 = arith.constant 0 : i32
    return %c0_i32, %c0_i32_0 : i32, i32
  }
  func.func @transform_3(%arg0: i32) -> (i32, i32) {
    %c0_i32 = arith.constant 0 : i32
    %c0_i32_0 = arith.constant 0 : i32
    %c0_i32_1 = arith.constant 0 : i32
    return %c0_i32, %c0_i32_0 : i32, i32
  }
  func.func @transform_4(%arg0: i32) -> (i32, i32) {
    %c0_i32 = arith.constant 0 : i32
    %c0_i32_0 = arith.constant 0 : i32
    %c0_i32_1 = arith.constant 0 : i32
    return %c0_i32, %c0_i32_0 : i32, i32
  }
  func.func @transform_5(%arg0: i32) -> (i32, i32) {
    %c0_i32 = arith.constant 0 : i32
    %c0_i32_0 = arith.constant 0 : i32
    return %c0_i32, %arg0 : i32, i32
  }
}

</mosaic_0001>

<llo_original>
// kernel: tpu_custom_call.1
$region0: #{tpu_custom_call.1}
  #allocation0 [shape = 'u32[]', space=smem, size = 0x4, offset = 0x4, fixed_abs, tag = 'smem constant byte address 0x4 - core index']
  #allocation1 [shape = 'u32[72,128]{1,0:T(1,128)}', space=vmem, size = 0x9000, scoped, tag = 'internal scratch']
  #allocation2 [shape = 'f32[1,1]{1,0:T(1,128)S(6)}', space=smem, size = 0x200, scoped, tag = 'scoped memory for tpu_custom_call.1']
  %s0 = inlined_call_operand.vmem [shape: f32[8,32], index: 0, kind: input, shape index: {}]
  %s1 = inlined_call_operand.vmem [shape: f32[32,16], index: 1, kind: input, shape index: {}]
  %s2 = inlined_call_operand.vmem [shape: f32[16,1], index: 2, kind: input, shape index: {}]
  %s3 = inlined_call_operand.vmem [shape: f32[1,16], index: 3, kind: input, shape index: {}]
  %s4 = inlined_call_operand.<no memory space> [shape: f32[1,1], index: 4, kind: input, shape index: {}]
  %s5 = inlined_call_operand.hbm [shape: f32[1,8], index: 5, kind: output, shape index: {}]
  %s6 = sld [smem:[#allocation0]]
  $region30: #{tpu_custom_call.1} parent=0
    _
  %s8 = ssub.s32 1, %s6
  %s9 = scalar_select 0, %s8, %s6
  %10 = sst [smem:[#allocation2]] %s4
  $region1: #{tpu_custom_call.1} parent=0
    #allocation3 [shape = 'u8[512]{0}', space=vmem, size = 0x400, scoped, tag = 'output window, operand 0, single buffered']
    #allocation4 [shape = 's32[1]{0}', space=sflag, size = 0x4, scoped, tag = 'scoped memory for tpu_custom_call.1']
    %11 = vsyncpa [#allocation4], 0
    // Predicated region
    $region2: #{tpu_custom_call.1} parent=1 // pred_check
      _
    $region3: #{tpu_custom_call.1} parent=1 // pred_check_branch
      %13 = sbr.rel (0) target = $region5
    $region4: #{tpu_custom_call.1} parent=1 // pred_region
      _
    $region5: #{tpu_custom_call.1} parent=1 // pred_fallthru
      _
    // Predicated region
    $region6: #{tpu_custom_call.1} parent=1 // pred_check
      _
    $region7: #{tpu_custom_call.1} parent=1 // pred_check_branch
      %15 = sbr.rel (0) target = $region9
    $region8: #{tpu_custom_call.1} parent=1 // pred_region
      _
    $region9: #{tpu_custom_call.1} parent=1 // pred_fallthru
      _
    // Predicated region
    $region10: #{tpu_custom_call.1} parent=1 // pred_check
      _
    $region11: #{tpu_custom_call.1} parent=1 // pred_check_branch
      %17 = sbr.rel (0) target = $region13
    $region12: #{tpu_custom_call.1} parent=1 // pred_region
      _
    $region13: #{tpu_custom_call.1} parent=1 // pred_fallthru
      _
    // Predicated region
    $region14: #{tpu_custom_call.1} parent=1 // pred_check
      _
    $region15: #{tpu_custom_call.1} parent=1 // pred_check_branch
      %19 = sbr.rel (0) target = $region17
    $region16: #{tpu_custom_call.1} parent=1 // pred_region
      _
    $region17: #{tpu_custom_call.1} parent=1 // pred_fallthru
      _
    // Predicated region
    $region18: #{tpu_custom_call.1} parent=1 // pred_check
      _
    $region19: #{tpu_custom_call.1} parent=1 // pred_check_branch
      %21 = sbr.rel (0) target = $region21
    $region20: #{tpu_custom_call.1} parent=1 // pred_region
      _
    $region21: #{tpu_custom_call.1} parent=1 // pred_fallthru
      _
    %v22 = vld [vmem:[%s0] sm:$0xff]
    %v23 = vld [vmem:[%s1] sm:$0xff]
    %v24 = vld [vmem:[%s1 + $0x8] sm:$0xff]
    %v25 = vld [vmem:[%s1 + $0x10] sm:$0xff]
    %v26 = vld [vmem:[%s1 + $0x18] sm:$0xff]
    %vm27 = vcmask 261120
    %v29 = vsel %vm27, %v22, 0
    %31 = vmatpush.msra.mxu0 0.0
    %32 = vmatpush.msra.mxu0 0.0
    %33 = vmatpush.msra.mxu0 0.0
    %34 = vmatpush.msra.mxu0 0.0
    %35 = vmatpush.msra.mxu0 0.0
    %36 = vmatpush.msra.mxu0 0.0
    %37 = vmatpush.msra.mxu0 0.0
    %38 = vmatpush.msra.mxu0 0.0
    %39 = vmatpush.msra.mxu0 0.0
    %40 = vmatpush.msra.mxu0 0.0
    %41 = vmatpush.msra.mxu0 0.0
    %42 = vmatpush.msra.mxu0 0.0
    %43 = vmatpush.msra.mxu0 %v26
    %44 = vmatpush.msra.mxu0 %v25
    %45 = vmatpush.msra.mxu0 %v24
    %46 = vmatpush.msra.mxu0 %v23
    %47 = vmatmul.f32.gmra.mxu0 %v29
    %v48 = vpop.f32.mrf.mxu0
    %v49 = vadd.f32 0.0, %v48
    %50 = vdwg.mxu0
    %51 = vxpose.xlu0.b32.start [1/16] %v49, 128
    %52 = vxpose.xlu0.b32.cont [2/16] 0.0, 128
    %53 = vxpose.xlu0.b32.cont [3/16] 0.0, 128
    %54 = vxpose.xlu0.b32.cont [4/16] 0.0, 128
    %55 = vxpose.xlu0.b32.cont [5/16] 0.0, 128
    %56 = vxpose.xlu0.b32.cont [6/16] 0.0, 128
    %57 = vxpose.xlu0.b32.cont [7/16] 0.0, 128
    %58 = vxpose.xlu0.b32.cont [8/16] 0.0, 128
    %59 = vxpose.xlu0.b32.cont [9/16] 0.0, 128
    %60 = vxpose.xlu0.b32.cont [10/16] 0.0, 128
    %61 = vxpose.xlu0.b32.cont [11/16] 0.0, 128
    %62 = vxpose.xlu0.b32.cont [12/16] 0.0, 128
    %63 = vxpose.xlu0.b32.cont [13/16] 0.0, 128
    %64 = vxpose.xlu0.b32.cont [14/16] 0.0, 128
    %65 = vxpose.xlu0.b32.cont [15/16] 0.0, 128
    %66 = vxpose.xlu0.b32.end [16/16] 0.0, 128
    %v67 = vpop.trf.xlu0
    %v68 = vpop.trf.xlu0
    %v69 = vpop.trf.xlu0
    %v70 = vpop.trf.xlu0
    %v71 = vpop.trf.xlu0
    %v72 = vpop.trf.xlu0
    %v73 = vpop.trf.xlu0
    %v74 = vpop.trf.xlu0
    %v75 = vpop.trf.xlu0
    %v76 = vpop.trf.xlu0
    %v77 = vpop.trf.xlu0
    %v78 = vpop.trf.xlu0
    %v79 = vpop.trf.xlu0
    %v80 = vpop.trf.xlu0
    %v81 = vpop.trf.xlu0
    %v82 = vpop.trf.xlu0
    %v83 = vld [vmem:[%s2] sm:$0xff]
    %v84 = vld [vmem:[%s2 + $0x8] sm:$0xff]
    %86 = vset.pattern.permute.xlu0 0
    %87 = vperm.xlu0 %86, %v83
    %v88 = vpop.permute.xlu0 %87
    %91 = vset.pattern.permute.xlu0 0
    %92 = vperm.xlu0 %91, %v84
    %v93 = vpop.permute.xlu0 %92
    %v95 = vadd.f32 %v67, %v88
    %v96 = vadd.f32 %v68, %v93
    %v97 = vmul.f32 %v95, 0.5
    %v98 = vmul.f32 %v96, 0.5
    %v99 = vtanh.pop %v97
    %v100 = vtanh.pop %v98
    %v101 = vmul.f32 %v99, 0.5
    %v102 = vmul.f32 %v100, 0.5
    %v103 = vadd.f32 %v101, 0.5
    %v104 = vadd.f32 %v102, 0.5
    %v105 = vld [vmem:[%s3] sm:$0x1]
    %s106 = sld [smem:[#allocation2]]
    %v107 = vstv %s106
    %vm108 = vcmask 130048
    %v110 = vsel %vm108, %v105, 0
    %112 = vmatpush.msra.mxu0 0.0
    %113 = vmatpush.msra.mxu0 0.0
    %114 = vmatpush.msra.mxu0 0.0
    %115 = vmatpush.msra.mxu0 0.0
    %116 = vmatpush.msra.mxu0 0.0
    %117 = vmatpush.msra.mxu0 0.0
    %118 = vmatpush.msra.mxu0 0.0
    %119 = vmatpush.msra.mxu0 0.0
    %120 = vmatpush.msra.mxu0 0.0
    %121 = vmatpush.msra.mxu0 0.0
    %122 = vmatpush.msra.mxu0 0.0
    %123 = vmatpush.msra.mxu0 0.0
    %124 = vmatpush.msra.mxu0 0.0
    %125 = vmatpush.msra.mxu0 0.0
    %126 = vmatpush.msra.mxu0 %v104
    %127 = vmatpush.msra.mxu0 %v103
    %128 = vmatmul.f32.gmra.mxu0 %v110
    %v129 = vpop.f32.mrf.mxu0
    %v130 = vadd.f32 %v107, %v129
    %131 = vdwg.mxu0
    %v132 = vmul.f32 %v130, 0.5
    %v133 = vtanh.pop %v132
    %v134 = vmul.f32 %v133, 0.5
    %v135 = vadd.f32 %v134, 0.5
    %vm136 = vcmask 57344
    %137 = vst.msk [vmem:[#allocation3] sm:$0x1] %vm136, %v135
    // Predicated region
    $region22: #{tpu_custom_call.1} parent=1 // pred_check
      _
    $region23: #{tpu_custom_call.1} parent=1 // pred_check_branch
      %139 = sbr.rel (0) target = $region25
    $region24: #{tpu_custom_call.1} parent=1 // pred_region
      %141 = vsyncadd [#allocation4], 0
      %s143 = sshll.u32 [#allocation3], 4
      %s144 = int_to_ptr.vmem [resolvable:$true] %s143
      %s145 = sshll.u32 %s5, 4
      %s146 = int_to_ptr.hbm [resolvable:$true] %s145
      %148 = dma.vmem_to_hbm [thread:$0]  %s144, 16, %s146, [#allocation4]
    $region25: #{tpu_custom_call.1} parent=1 // pred_fallthru
      _
    // Predicated region
    $region26: #{tpu_custom_call.1} parent=1 // pred_check
      _
    $region27: #{tpu_custom_call.1} parent=1 // pred_check_branch
      %150 = sbr.rel (0) target = $region29
    $region28: #{tpu_custom_call.1} parent=1 // pred_region
      %152 = dma.done [#allocation4], 16
    $region29: #{tpu_custom_call.1} parent=1 // pred_fallthru
      _
    %153 = vsyncpa [#allocation4], 1

</llo_original>
